<compile_context>
chip_gen: v7x
topology: tpu7x:2x2x1
jax: 0.10.0
libtpu: 0.0.40
codegen_flags: <defaults>
</compile_context>

<pallas_src>
import functools
import math

import jax
import jax.numpy as jnp
from jax.experimental import pallas as pl
from jax.experimental.pallas import tpu as pltpu


def _round_up(x, m):
    return ((x + m - 1) // m) * m


def _fsp_kernel(g_ref, m_ref, p_ref, o_ref, *,
                cp, hdim, r_w1m, r_b1, r_w2, r_b2, inv_hw):
    """Whole batch in one step. g/m/o: (N, Cp, HWp); p: packed FC params slab."""
    g = g_ref[...]                                    # (N, Cp, HWp) guidePath
    m = m_ref[...]                                    # (N, Cp, HWp) mainPath
    # Global average pool of cat((guide, main), dim=C), kept as two halves so
    # no in-kernel channel concat is needed.  Zero-padded spatial lanes are
    # harmless because inv_hw uses the true H*W element count.
    pg = jnp.sum(g, axis=-1) * inv_hw                 # (N, Cp)
    pm = jnp.sum(m, axis=-1) * inv_hw                 # (N, Cp)
    # Unpack the resident parameter slab (static ref slices, 8-row aligned).
    w1gT = p_ref[0:cp, 0:hdim]                        # (Cp, h) guide half of FC1^T
    w1mT = p_ref[r_w1m:r_w1m + cp, 0:hdim]            # (Cp, h) main half of FC1^T
    b1 = p_ref[r_b1:r_b1 + 1, 0:hdim]                 # (1, h)
    w2T = p_ref[r_w2:r_w2 + hdim, 0:cp]               # (h, Cp) FC2^T
    b2 = p_ref[r_b2:r_b2 + 1, 0:cp]                   # (1, Cp)
    # FC1 + ReLU, batched over all N samples (one MXU pass per pooled half).
    hid = (jnp.dot(pg, w1gT, preferred_element_type=jnp.float32)
           + jnp.dot(pm, w1mT, preferred_element_type=jnp.float32) + b1)
    hid = jnp.maximum(hid, 0.0)                       # (N, h)
    # FC2 + Sigmoid -> per-(sample, channel) recalibration weight.
    w_ch = jax.nn.sigmoid(
        jnp.dot(hid, w2T, preferred_element_type=jnp.float32) + b2)   # (N, Cp)
    # out = main + channel_weight * guide (broadcast over H*W lanes).
    o_ref[...] = m + w_ch[:, :, None] * g


def fsp_forward(params, guide, main):
    """FSP forward. guide/main: (N, C, H, W) f32 (PyTorch NCHW). Returns (N, C, H, W)."""
    n, c, hh, ww = main.shape
    hw = hh * ww
    hdim = params["w1"].shape[0]
    cp = _round_up(c, 8)
    hwp = _round_up(hw, 128)

    g = guide.reshape(n, c, hw)
    m = main.reshape(n, c, hw)
    if cp != c or hwp != hw:
        g = jnp.pad(g, ((0, 0), (0, cp - c), (0, hwp - hw)))
        m = jnp.pad(m, ((0, 0), (0, cp - c), (0, hwp - hw)))

    # Pack FC1^T (guide/main halves), b1, FC2^T and b2 into one f32 slab with
    # 8-row-aligned sections.  PyTorch Linear layout: w1 (h, 2C), w2 (C, h);
    # the FSP concat order is (guide, main), so w1[:, :C] acts on the guide pool.
    r_w1m = cp
    r_b1 = 2 * cp
    r_w2 = r_b1 + 8
    r_b2 = r_w2 + _round_up(hdim, 8)
    rows = r_b2 + 8
    lane_w = _round_up(max(cp, hdim), 128)
    slab = jnp.zeros((rows, lane_w), jnp.float32)
    slab = slab.at[0:c, 0:hdim].set(params["w1"][:, :c].T)
    slab = slab.at[r_w1m:r_w1m + c, 0:hdim].set(params["w1"][:, c:].T)
    slab = slab.at[r_b1, 0:hdim].set(params["b1"])
    slab = slab.at[r_w2:r_w2 + hdim, 0:c].set(params["w2"].T)
    slab = slab.at[r_b2, 0:c].set(params["b2"])

    feat_spec = pl.BlockSpec((n, cp, hwp), lambda i: (0, 0, 0))
    out = pl.pallas_call(
        functools.partial(_fsp_kernel, cp=cp, hdim=hdim, r_w1m=r_w1m,
                          r_b1=r_b1, r_w2=r_w2, r_b2=r_b2, inv_hw=1.0 / hw),
        out_shape=jax.ShapeDtypeStruct((n, cp, hwp), jnp.float32),
        grid=(1,),
        in_specs=[
            feat_spec,                                       # guidePath
            feat_spec,                                       # mainPath (aliased to out)
            pl.BlockSpec((rows, lane_w), lambda i: (0, 0)),  # packed FC params slab
        ],
        out_specs=feat_spec,
        input_output_aliases={1: 0},
        compiler_params=pltpu.CompilerParams(
            dimension_semantics=("arbitrary",)),
    )(g, m, slab)

    return out[:, :c, :hw].reshape(n, c, hh, ww)


def fsp_reference(params, guide, main):
    """Pure-JAX reference matching the PyTorch module exactly."""
    combined = jnp.concatenate([guide, main], axis=1)          # (N, 2C, H, W)
    y = combined.mean(axis=(2, 3))                             # (N, 2C)  global avg pool
    h = jnp.maximum(y @ params["w1"].T + params["b1"], 0.0)    # Linear + ReLU
    w_ch = jax.nn.sigmoid(h @ params["w2"].T + params["b2"])   # Linear + Sigmoid
    return main + w_ch[:, :, None, None] * guide


def init_params(key, in_planes, out_planes, reduction=16):
    """nn.Linear-style init: U(-1/sqrt(fan_in), 1/sqrt(fan_in))."""
    hid = out_planes // reduction
    k1, k2, k3, k4 = jax.random.split(key, 4)
    s1 = 1.0 / math.sqrt(2 * in_planes)
    s2 = 1.0 / math.sqrt(hid)
    return {
        "w1": jax.random.uniform(k1, (hid, 2 * in_planes), jnp.float32, -s1, s1),
        "b1": jax.random.uniform(k2, (hid,), jnp.float32, -s1, s1),
        "w2": jax.random.uniform(k3, (out_planes, hid), jnp.float32, -s2, s2),
        "b2": jax.random.uniform(k4, (out_planes,), jnp.float32, -s2, s2),
    }


if __name__ == "__main__":
    N, C, H, W = 2, 64, 16, 16          # in_planes = out_planes = 64, reduction = 16
    key = jax.random.PRNGKey(0)
    kp, kg, km = jax.random.split(key, 3)
    params = init_params(kp, C, C, reduction=16)
    guide = jax.random.normal(kg, (N, C, H, W), jnp.float32)   # guidePath
    main = jax.random.normal(km, (N, C, H, W), jnp.float32)    # mainPath

    fwd = jax.jit(fsp_forward)
    out = jax.block_until_ready(fwd(params, guide, main))
    ref = fsp_reference(params, guide, main)

    assert out.shape == (N, C, H, W), out.shape
    assert jnp.all(jnp.isfinite(out))
    assert jnp.allclose(out, ref, atol=1e-5, rtol=1e-5), float(jnp.max(jnp.abs(out - ref)))
    print("KERNEL_OK")
</pallas_src>

<mosaic_0001>
module attributes {stable_mosaic.version = 11 : i64} {
  func.func @_fsp_kernel(%arg0: i32, %arg1: memref<2x64x256xf32, #tpu.memory_space<vmem>>, %arg2: memref<2x64x256xf32, #tpu.memory_space<vmem>>, %arg3: memref<152x128xf32, #tpu.memory_space<vmem>>, %arg4: memref<2x64x256xf32, #tpu.memory_space<vmem>>) attributes {dimension_semantics = [#tpu.dimension_semantics<arbitrary>], iteration_bounds = array<i64: 1>, scalar_prefetch = 0 : i64, scratch_operands = 0 : i64, tpu.core_type = #tpu.core_type<tc>, window_params = [{pipeline_mode = #tpu.pipeline_mode<synchronous>, transform_indices = @transform_0, window_bounds = array<i64: 2, 64, 256>}, {pipeline_mode = #tpu.pipeline_mode<synchronous>, transform_indices = @transform_1, window_bounds = array<i64: 2, 64, 256>}, {pipeline_mode = #tpu.pipeline_mode<synchronous>, transform_indices = @transform_2, window_bounds = array<i64: 152, 128>}, {pipeline_mode = #tpu.pipeline_mode<synchronous>, transform_indices = @transform_3, window_bounds = array<i64: 2, 64, 256>}]} {
    %c0 = arith.constant 0 : index
    %c0_0 = arith.constant 0 : index
    %c0_1 = arith.constant 0 : index
    %0 = vector.load %arg1[%c0, %c0_0, %c0_1] : memref<2x64x256xf32, #tpu.memory_space<vmem>>, vector<2x64x256xf32>
    %c0_2 = arith.constant 0 : index
    %c0_3 = arith.constant 0 : index
    %c0_4 = arith.constant 0 : index
    %1 = vector.load %arg2[%c0_2, %c0_3, %c0_4] : memref<2x64x256xf32, #tpu.memory_space<vmem>>, vector<2x64x256xf32>
    %cst = arith.constant dense<0.000000e+00> : vector<2x64xf32>
    %2 = vector.multi_reduction <add>, %0, %cst [2] : vector<2x64x256xf32> to vector<2x64xf32>
    %cst_5 = arith.constant 3.906250e-03 : f32
    %3 = vector.broadcast %cst_5 : f32 to vector<2x64xf32>
    %4 = arith.mulf %2, %3 : vector<2x64xf32>
    %cst_6 = arith.constant dense<0.000000e+00> : vector<2x64xf32>
    %5 = vector.multi_reduction <add>, %1, %cst_6 [2] : vector<2x64x256xf32> to vector<2x64xf32>
    %cst_7 = arith.constant 3.906250e-03 : f32
    %6 = vector.broadcast %cst_7 : f32 to vector<2x64xf32>
    %7 = arith.mulf %5, %6 : vector<2x64xf32>
    %c0_8 = arith.constant 0 : index
    %c0_9 = arith.constant 0 : index
    %8 = vector.load %arg3[%c0_8, %c0_9] : memref<152x128xf32, #tpu.memory_space<vmem>>, vector<64x4xf32>
    %c64 = arith.constant 64 : index
    %c0_10 = arith.constant 0 : index
    %9 = vector.load %arg3[%c64, %c0_10] : memref<152x128xf32, #tpu.memory_space<vmem>>, vector<64x4xf32>
    %c128 = arith.constant 128 : index
    %c0_11 = arith.constant 0 : index
    %10 = vector.load %arg3[%c128, %c0_11] : memref<152x128xf32, #tpu.memory_space<vmem>>, vector<1x4xf32>
    %c136 = arith.constant 136 : index
    %c0_12 = arith.constant 0 : index
    %11 = vector.load %arg3[%c136, %c0_12] : memref<152x128xf32, #tpu.memory_space<vmem>>, vector<4x64xf32>
    %c144 = arith.constant 144 : index
    %c0_13 = arith.constant 0 : index
    %12 = vector.load %arg3[%c144, %c0_13] : memref<152x128xf32, #tpu.memory_space<vmem>>, vector<1x64xf32>
    %cst_14 = arith.constant dense<0.000000e+00> : vector<2x4xf32>
    %13 = tpu.matmul %4, %8, %cst_14 {dimension_numbers = #tpu.dot_dimension_numbers<[1], [0], [0], [1], [0, 0, 1, 1], [], []>} : vector<2x64xf32>, vector<64x4xf32>, vector<2x4xf32> -> vector<2x4xf32>
    %cst_15 = arith.constant dense<0.000000e+00> : vector<2x4xf32>
    %14 = tpu.matmul %7, %9, %cst_15 {dimension_numbers = #tpu.dot_dimension_numbers<[1], [0], [0], [1], [0, 0, 1, 1], [], []>} : vector<2x64xf32>, vector<64x4xf32>, vector<2x4xf32> -> vector<2x4xf32>
    %15 = arith.addf %13, %14 : vector<2x4xf32>
    %16 = vector.broadcast %10 : vector<1x4xf32> to vector<2x4xf32>
    %17 = arith.addf %15, %16 : vector<2x4xf32>
    %cst_16 = arith.constant 0.000000e+00 : f32
    %18 = vector.broadcast %cst_16 : f32 to vector<2x4xf32>
    %19 = arith.maximumf %17, %18 : vector<2x4xf32>
    %cst_17 = arith.constant dense<0.000000e+00> : vector<2x64xf32>
    %20 = tpu.matmul %19, %11, %cst_17 {dimension_numbers = #tpu.dot_dimension_numbers<[1], [0], [0], [1], [0, 0, 1, 1], [], []>} : vector<2x4xf32>, vector<4x64xf32>, vector<2x64xf32> -> vector<2x64xf32>
    %21 = vector.broadcast %12 : vector<1x64xf32> to vector<2x64xf32>
    %22 = arith.addf %20, %21 : vector<2x64xf32>
    %23 = arith.negf %22 : vector<2x64xf32>
    %24 = math.exp %23 : vector<2x64xf32>
    %cst_18 = arith.constant 1.000000e+00 : f32
    %25 = vector.broadcast %cst_18 : f32 to vector<2x64xf32>
    %26 = arith.addf %25, %24 : vector<2x64xf32>
    %27 = arith.divf %25, %26 : vector<2x64xf32>
    %28 = vector.shape_cast %27 : vector<2x64xf32> to vector<2x64x1xf32>
    %29 = vector.broadcast %28 : vector<2x64x1xf32> to vector<2x64x256xf32>
    %30 = arith.mulf %29, %0 : vector<2x64x256xf32>
    %31 = arith.addf %1, %30 : vector<2x64x256xf32>
    %c0_19 = arith.constant 0 : index
    %c0_20 = arith.constant 0 : index
    %c0_21 = arith.constant 0 : index
    %32 = vector.load %arg4[%c0_19, %c0_20, %c0_21] : memref<2x64x256xf32, #tpu.memory_space<vmem>>, vector<2x64x256xf32>
    tpu.vector_store %arg4[%c0_19, %c0_20, %c0_21], %31 {strides = array<i32>} : memref<2x64x256xf32, #tpu.memory_space<vmem>>, vector<2x64x256xf32>,
    return
  }
  func.func @transform_0(%arg0: i32) -> (i32, i32, i32) {
    %c0_i32 = arith.constant 0 : i32
    %c0_i32_0 = arith.constant 0 : i32
    %c0_i32_1 = arith.constant 0 : i32
    %c0_i32_2 = arith.constant 0 : i32
    return %c0_i32, %c0_i32_0, %c0_i32_1 : i32, i32, i32
  }
  func.func @transform_1(%arg0: i32) -> (i32, i32, i32) {
    %c0_i32 = arith.constant 0 : i32
    %c0_i32_0 = arith.constant 0 : i32
    %c0_i32_1 = arith.constant 0 : i32
    %c0_i32_2 = arith.constant 0 : i32
    return %c0_i32, %c0_i32_0, %c0_i32_1 : i32, i32, i32
  }
  func.func @transform_2(%arg0: i32) -> (i32, i32) {
    %c0_i32 = arith.constant 0 : i32
    %c0_i32_0 = arith.constant 0 : i32
    %c0_i32_1 = arith.constant 0 : i32
    return %c0_i32, %c0_i32_0 : i32, i32
  }
  func.func @transform_3(%arg0: i32) -> (i32, i32, i32) {
    %c0_i32 = arith.constant 0 : i32
    %c0_i32_0 = arith.constant 0 : i32
    %c0_i32_1 = arith.constant 0 : i32
    %c0_i32_2 = arith.constant 0 : i32
    return %c0_i32, %c0_i32_0, %c0_i32_1 : i32, i32, i32
  }
}

</mosaic_0001>

<llo_original>
// kernel: fsp_forward.1
$region0: #{fsp_forward.1}
  #allocation0 [shape = 'u32[]', space=smem, size = 0x4, offset = 0x4, fixed_abs, tag = 'smem constant byte address 0x4 - core index']
  #allocation1 [shape = 'u32[144,128]{1,0:T(1,128)}', space=vmem, size = 0x12000, scoped, tag = 'internal scratch']
  %s0 = inlined_call_operand.vmem [shape: f32[2,64,256], index: 0, kind: input, shape index: {}]
  %s1 = inlined_call_operand.vmem [shape: f32[2,64,256], index: 1, kind: input, shape index: {}, may-alias: {1,3}]
  %s2 = inlined_call_operand.vmem [shape: f32[152,128], index: 2, kind: input, shape index: {}]
  %s3 = inlined_call_operand.vmem [shape: f32[2,64,256], index: 3, kind: output, shape index: {}, may-alias: {1,3}]
  %s4 = sld [smem:[#allocation0]]
  $region22: #{fsp_forward.1} parent=0
    _
  %s6 = ssub.s32 1, %s4
  %s7 = scalar_select 0, %s6, %s4
  // Predicated region
  $region2: #{fsp_forward.1} parent=0 // pred_check
    _
  $region3: #{fsp_forward.1} parent=0 // pred_check_branch
    %9 = sbr.rel (0) target = $region5
  $region4: #{fsp_forward.1} parent=0 // pred_region
    _
  $region5: #{fsp_forward.1} parent=0 // pred_fallthru
    _
  // Predicated region
  $region6: #{fsp_forward.1} parent=0 // pred_check
    _
  $region7: #{fsp_forward.1} parent=0 // pred_check_branch
    %11 = sbr.rel (0) target = $region9
  $region8: #{fsp_forward.1} parent=0 // pred_region
    _
  $region9: #{fsp_forward.1} parent=0 // pred_fallthru
    _
  // Predicated region
  $region10: #{fsp_forward.1} parent=0 // pred_check
    _
  $region11: #{fsp_forward.1} parent=0 // pred_check_branch
    %13 = sbr.rel (0) target = $region13
  $region12: #{fsp_forward.1} parent=0 // pred_region
    _
  $region13: #{fsp_forward.1} parent=0 // pred_fallthru
    _
  %v14 = vld [vmem:[%s0] sm:$0xff]
  %v15 = vld [vmem:[%s0 + $0x8] sm:$0xff]
  %v16 = vld [vmem:[%s0 + $0x10] sm:$0xff]
  %v17 = vld [vmem:[%s0 + $0x18] sm:$0xff]
  %v18 = vld [vmem:[%s0 + $0x20] sm:$0xff]
  %v19 = vld [vmem:[%s0 + $0x28] sm:$0xff]
  %v20 = vld [vmem:[%s0 + $0x30] sm:$0xff]
  %v21 = vld [vmem:[%s0 + $0x38] sm:$0xff]
  %v22 = vld [vmem:[%s0 + $0x40] sm:$0xff]
  %v23 = vld [vmem:[%s0 + $0x48] sm:$0xff]
  %v24 = vld [vmem:[%s0 + $0x50] sm:$0xff]
  %v25 = vld [vmem:[%s0 + $0x58] sm:$0xff]
  %v26 = vld [vmem:[%s0 + $0x60] sm:$0xff]
  %v27 = vld [vmem:[%s0 + $0x68] sm:$0xff]
  %v28 = vld [vmem:[%s0 + $0x70] sm:$0xff]
  %v29 = vld [vmem:[%s0 + $0x78] sm:$0xff]
  %v30 = vld [vmem:[%s0 + $0x80] sm:$0xff]
  %v31 = vld [vmem:[%s0 + $0x88] sm:$0xff]
  %v32 = vld [vmem:[%s0 + $0x90] sm:$0xff]
  %v33 = vld [vmem:[%s0 + $0x98] sm:$0xff]
  %v34 = vld [vmem:[%s0 + $0xa0] sm:$0xff]
  %v35 = vld [vmem:[%s0 + $0xa8] sm:$0xff]
  %v36 = vld [vmem:[%s0 + $0xb0] sm:$0xff]
  %v37 = vld [vmem:[%s0 + $0xb8] sm:$0xff]
  %v38 = vld [vmem:[%s0 + $0xc0] sm:$0xff]
  %v39 = vld [vmem:[%s0 + $0xc8] sm:$0xff]
  %v40 = vld [vmem:[%s0 + $0xd0] sm:$0xff]
  %v41 = vld [vmem:[%s0 + $0xd8] sm:$0xff]
  %v42 = vld [vmem:[%s0 + $0xe0] sm:$0xff]
  %v43 = vld [vmem:[%s0 + $0xe8] sm:$0xff]
  %v44 = vld [vmem:[%s0 + $0xf0] sm:$0xff]
  %v45 = vld [vmem:[%s0 + $0xf8] sm:$0xff]
  %v46 = vld [vmem:[%s1] sm:$0xff]
  %v47 = vld [vmem:[%s1 + $0x8] sm:$0xff]
  %v48 = vld [vmem:[%s1 + $0x10] sm:$0xff]
  %v49 = vld [vmem:[%s1 + $0x18] sm:$0xff]
  %v50 = vld [vmem:[%s1 + $0x20] sm:$0xff]
  %v51 = vld [vmem:[%s1 + $0x28] sm:$0xff]
  %v52 = vld [vmem:[%s1 + $0x30] sm:$0xff]
  %v53 = vld [vmem:[%s1 + $0x38] sm:$0xff]
  %v54 = vld [vmem:[%s1 + $0x40] sm:$0xff]
  %v55 = vld [vmem:[%s1 + $0x48] sm:$0xff]
  %v56 = vld [vmem:[%s1 + $0x50] sm:$0xff]
  %v57 = vld [vmem:[%s1 + $0x58] sm:$0xff]
  %v58 = vld [vmem:[%s1 + $0x60] sm:$0xff]
  %v59 = vld [vmem:[%s1 + $0x68] sm:$0xff]
  %v60 = vld [vmem:[%s1 + $0x70] sm:$0xff]
  %v61 = vld [vmem:[%s1 + $0x78] sm:$0xff]
  %v62 = vld [vmem:[%s1 + $0x80] sm:$0xff]
  %v63 = vld [vmem:[%s1 + $0x88] sm:$0xff]
  %v64 = vld [vmem:[%s1 + $0x90] sm:$0xff]
  %v65 = vld [vmem:[%s1 + $0x98] sm:$0xff]
  %v66 = vld [vmem:[%s1 + $0xa0] sm:$0xff]
  %v67 = vld [vmem:[%s1 + $0xa8] sm:$0xff]
  %v68 = vld [vmem:[%s1 + $0xb0] sm:$0xff]
  %v69 = vld [vmem:[%s1 + $0xb8] sm:$0xff]
  %v70 = vld [vmem:[%s1 + $0xc0] sm:$0xff]
  %v71 = vld [vmem:[%s1 + $0xc8] sm:$0xff]
  %v72 = vld [vmem:[%s1 + $0xd0] sm:$0xff]
  %v73 = vld [vmem:[%s1 + $0xd8] sm:$0xff]
  %v74 = vld [vmem:[%s1 + $0xe0] sm:$0xff]
  %v75 = vld [vmem:[%s1 + $0xe8] sm:$0xff]
  %v76 = vld [vmem:[%s1 + $0xf0] sm:$0xff]
  %v77 = vld [vmem:[%s1 + $0xf8] sm:$0xff]
  %v78 = vadd.f32 %v14, %v15
  %79 = vadd.xlane.f32.xlu0 %v78
  %v80 = vpop.xlane.xlu0 %79
  %v81 = vadd.f32 %v16, %v17
  %82 = vadd.xlane.f32.xlu0 %v81
  %v83 = vpop.xlane.xlu0 %82
  %v84 = vadd.f32 %v18, %v19
  %85 = vadd.xlane.f32.xlu0 %v84
  %v86 = vpop.xlane.xlu0 %85
  %v87 = vadd.f32 %v20, %v21
  %88 = vadd.xlane.f32.xlu0 %v87
  %v89 = vpop.xlane.xlu0 %88
  %v90 = vadd.f32 %v22, %v23
  %91 = vadd.xlane.f32.xlu0 %v90
  %v92 = vpop.xlane.xlu0 %91
  %v93 = vadd.f32 %v24, %v25
  %94 = vadd.xlane.f32.xlu0 %v93
  %v95 = vpop.xlane.xlu0 %94
  %v96 = vadd.f32 %v26, %v27
  %97 = vadd.xlane.f32.xlu0 %v96
  %v98 = vpop.xlane.xlu0 %97
  %v99 = vadd.f32 %v28, %v29
  %100 = vadd.xlane.f32.xlu0 %v99
  %v101 = vpop.xlane.xlu0 %100
  %v102 = vadd.f32 %v30, %v31
  %103 = vadd.xlane.f32.xlu0 %v102
  %v104 = vpop.xlane.xlu0 %103
  %v105 = vadd.f32 %v32, %v33
  %106 = vadd.xlane.f32.xlu0 %v105
  %v107 = vpop.xlane.xlu0 %106
  %v108 = vadd.f32 %v34, %v35
  %109 = vadd.xlane.f32.xlu0 %v108
  %v110 = vpop.xlane.xlu0 %109
  %v111 = vadd.f32 %v36, %v37
  %112 = vadd.xlane.f32.xlu0 %v111
  %v113 = vpop.xlane.xlu0 %112
  %v114 = vadd.f32 %v38, %v39
  %115 = vadd.xlane.f32.xlu0 %v114
  %v116 = vpop.xlane.xlu0 %115
  %v117 = vadd.f32 %v40, %v41
  %118 = vadd.xlane.f32.xlu0 %v117
  %v119 = vpop.xlane.xlu0 %118
  %v120 = vadd.f32 %v42, %v43
  %121 = vadd.xlane.f32.xlu0 %v120
  %v122 = vpop.xlane.xlu0 %121
  %v123 = vadd.f32 %v44, %v45
  %124 = vadd.xlane.f32.xlu0 %v123
  %v125 = vpop.xlane.xlu0 %124
  %v126 = vmul.f32 %v80, 0.00390625
  %v127 = vmul.f32 %v83, 0.00390625
  %v128 = vmul.f32 %v86, 0.00390625
  %v129 = vmul.f32 %v89, 0.00390625
  %v130 = vmul.f32 %v92, 0.00390625
  %v131 = vmul.f32 %v95, 0.00390625
  %v132 = vmul.f32 %v98, 0.00390625
  %v133 = vmul.f32 %v101, 0.00390625
  %v134 = vmul.f32 %v104, 0.00390625
  %v135 = vmul.f32 %v107, 0.00390625
  %v136 = vmul.f32 %v110, 0.00390625
  %v137 = vmul.f32 %v113, 0.00390625
  %v138 = vmul.f32 %v116, 0.00390625
  %v139 = vmul.f32 %v119, 0.00390625
  %v140 = vmul.f32 %v122, 0.00390625
  %v141 = vmul.f32 %v125, 0.00390625
  %v142 = vadd.f32 %v46, %v47
  %143 = vadd.xlane.f32.xlu0 %v142
  %v144 = vpop.xlane.xlu0 %143
  %v145 = vadd.f32 %v48, %v49
  %146 = vadd.xlane.f32.xlu0 %v145
  %v147 = vpop.xlane.xlu0 %146
  %v148 = vadd.f32 %v50, %v51
  %149 = vadd.xlane.f32.xlu0 %v148
  %v150 = vpop.xlane.xlu0 %149
  %v151 = vadd.f32 %v52, %v53
  %152 = vadd.xlane.f32.xlu0 %v151
  %v153 = vpop.xlane.xlu0 %152
  %v154 = vadd.f32 %v54, %v55
  %155 = vadd.xlane.f32.xlu0 %v154
  %v156 = vpop.xlane.xlu0 %155
  %v157 = vadd.f32 %v56, %v57
  %158 = vadd.xlane.f32.xlu0 %v157
  %v159 = vpop.xlane.xlu0 %158
  %v160 = vadd.f32 %v58, %v59
  %161 = vadd.xlane.f32.xlu0 %v160
  %v162 = vpop.xlane.xlu0 %161
  %v163 = vadd.f32 %v60, %v61
  %164 = vadd.xlane.f32.xlu0 %v163
  %v165 = vpop.xlane.xlu0 %164
  %v166 = vadd.f32 %v62, %v63
  %167 = vadd.xlane.f32.xlu0 %v166
  %v168 = vpop.xlane.xlu0 %167
  %v169 = vadd.f32 %v64, %v65
  %170 = vadd.xlane.f32.xlu0 %v169
  %v171 = vpop.xlane.xlu0 %170
  %v172 = vadd.f32 %v66, %v67
  %173 = vadd.xlane.f32.xlu0 %v172
  %v174 = vpop.xlane.xlu0 %173
  %v175 = vadd.f32 %v68, %v69
  %176 = vadd.xlane.f32.xlu0 %v175
  %v177 = vpop.xlane.xlu0 %176
  %v178 = vadd.f32 %v70, %v71
  %179 = vadd.xlane.f32.xlu0 %v178
  %v180 = vpop.xlane.xlu0 %179
  %v181 = vadd.f32 %v72, %v73
  %182 = vadd.xlane.f32.xlu0 %v181
  %v183 = vpop.xlane.xlu0 %182
  %v184 = vadd.f32 %v74, %v75
  %185 = vadd.xlane.f32.xlu0 %v184
  %v186 = vpop.xlane.xlu0 %185
  %v187 = vadd.f32 %v76, %v77
  %188 = vadd.xlane.f32.xlu0 %v187
  %v189 = vpop.xlane.xlu0 %188
  %v190 = vmul.f32 %v144, 0.00390625
  %v191 = vmul.f32 %v147, 0.00390625
  %v192 = vmul.f32 %v150, 0.00390625
  %v193 = vmul.f32 %v153, 0.00390625
  %v194 = vmul.f32 %v156, 0.00390625
  %v195 = vmul.f32 %v159, 0.00390625
  %v196 = vmul.f32 %v162, 0.00390625
  %v197 = vmul.f32 %v165, 0.00390625
  %v198 = vmul.f32 %v168, 0.00390625
  %v199 = vmul.f32 %v171, 0.00390625
  %v200 = vmul.f32 %v174, 0.00390625
  %v201 = vmul.f32 %v177, 0.00390625
  %v202 = vmul.f32 %v180, 0.00390625
  %v203 = vmul.f32 %v183, 0.00390625
  %v204 = vmul.f32 %v186, 0.00390625
  %v205 = vmul.f32 %v189, 0.00390625
  %v206 = vld [vmem:[%s2] sm:$0xff]
  %v207 = vld [vmem:[%s2 + $0x8] sm:$0xff]
  %v208 = vld [vmem:[%s2 + $0x10] sm:$0xff]
  %v209 = vld [vmem:[%s2 + $0x18] sm:$0xff]
  %v210 = vld [vmem:[%s2 + $0x20] sm:$0xff]
  %v211 = vld [vmem:[%s2 + $0x28] sm:$0xff]
  %v212 = vld [vmem:[%s2 + $0x30] sm:$0xff]
  %v213 = vld [vmem:[%s2 + $0x38] sm:$0xff]
  %v214 = vld [vmem:[%s2 + $0x40] sm:$0xff]
  %v215 = vld [vmem:[%s2 + $0x48] sm:$0xff]
  %v216 = vld [vmem:[%s2 + $0x50] sm:$0xff]
  %v217 = vld [vmem:[%s2 + $0x58] sm:$0xff]
  %v218 = vld [vmem:[%s2 + $0x60] sm:$0xff]
  %v219 = vld [vmem:[%s2 + $0x68] sm:$0xff]
  %v220 = vld [vmem:[%s2 + $0x70] sm:$0xff]
  %v221 = vld [vmem:[%s2 + $0x78] sm:$0xff]
  %v222 = vld [vmem:[%s2 + $0x80] sm:$0x1]
  %v223 = vld [vmem:[%s2 + $0x88] sm:$0xf]
  %v224 = vld [vmem:[%s2 + $0x90] sm:$0x1]
  %v241 = vlaneseq
  %v242 = vand.u32 %v241, 127
  %v243 = vlaneseq
  %v244 = vshrl.u32 %v243, 7
  %v245 = vsub.s32 %v242, %v244
  %v246 = vrot.slane %v190, %v245
  %v247 = vadd.s32 %v242, 4294967288
  %v248 = vlaneseq
  %v249 = vshrl.u32 %v248, 7
  %v250 = vsub.s32 %v247, %v249
  %v251 = vrot.slane %v191, %v250
  %vm252 = vcmask 130112
  %v253 = vsel %vm252, %v251, %v246
  %v254 = vadd.s32 %v242, 4294967280
  %v255 = vlaneseq
  %v256 = vshrl.u32 %v255, 7
  %v257 = vsub.s32 %v254, %v256
  %v258 = vrot.slane %v192, %v257
  %vm259 = vcmask 195712
  %v260 = vsel %vm259, %v258, %v253
  %v261 = vadd.s32 %v242, 4294967272
  %v262 = vlaneseq
  %v263 = vshrl.u32 %v262, 7
  %v264 = vsub.s32 %v261, %v263
  %v265 = vrot.slane %v193, %v264
  %vm266 = vcmask 261312
  %v267 = vsel %vm266, %v265, %v260
  %v268 = vadd.s32 %v242, 4294967264
  %v269 = vlaneseq
  %v270 = vshrl.u32 %v269, 7
  %v271 = vsub.s32 %v268, %v270
  %v272 = vrot.slane %v194, %v271
  %vm273 = vcmask 326912
  %v274 = vsel %vm273, %v272, %v267
  %v275 = vadd.s32 %v242, 4294967256
  %v276 = vlaneseq
  %v277 = vshrl.u32 %v276, 7
  %v278 = vsub.s32 %v275, %v277
  %v279 = vrot.slane %v195, %v278
  %vm280 = vcmask 392512
  %v281 = vsel %vm280, %v279, %v274
  %v282 = vadd.s32 %v242, 4294967248
  %v283 = vlaneseq
  %v284 = vshrl.u32 %v283, 7
  %v285 = vsub.s32 %v282, %v284
  %v286 = vrot.slane %v196, %v285
  %vm287 = vcmask 458112
  %v288 = vsel %vm287, %v286, %v281
  %v289 = vadd.s32 %v242, 4294967240
  %v290 = vlaneseq
  %v291 = vshrl.u32 %v290, 7
  %v292 = vsub.s32 %v289, %v291
  %v293 = vrot.slane %v197, %v292
  %vm294 = vcmask 523712
  %v295 = vsel %vm294, %v293, %v288
  %v296 = vlaneseq
  %v297 = vshrl.u32 %v296, 7
  %v298 = vsub.s32 %v242, %v297
  %v299 = vrot.slane %v198, %v298
  %v300 = vlaneseq
  %v301 = vshrl.u32 %v300, 7
  %v302 = vsub.s32 %v247, %v301
  %v303 = vrot.slane %v199, %v302
  %v304 = vsel %vm252, %v303, %v299
  %v305 = vlaneseq
  %v306 = vshrl.u32 %v305, 7
  %v307 = vsub.s32 %v254, %v306
  %v308 = vrot.slane %v200, %v307
  %v309 = vsel %vm259, %v308, %v304
  %v310 = vlaneseq
  %v311 = vshrl.u32 %v310, 7
  %v312 = vsub.s32 %v261, %v311
  %v313 = vrot.slane %v201, %v312
  %v314 = vsel %vm266, %v313, %v309
  %v315 = vlaneseq
  %v316 = vshrl.u32 %v315, 7
  %v317 = vsub.s32 %v268, %v316
  %v318 = vrot.slane %v202, %v317
  %v319 = vsel %vm273, %v318, %v314
  %v320 = vlaneseq
  %v321 = vshrl.u32 %v320, 7
  %v322 = vsub.s32 %v275, %v321
  %v323 = vrot.slane %v203, %v322
  %v324 = vsel %vm280, %v323, %v319
  %v325 = vlaneseq
  %v326 = vshrl.u32 %v325, 7
  %v327 = vsub.s32 %v282, %v326
  %v328 = vrot.slane %v204, %v327
  %v329 = vsel %vm287, %v328, %v324
  %v330 = vlaneseq
  %v331 = vshrl.u32 %v330, 7
  %v332 = vsub.s32 %v289, %v331
  %v333 = vrot.slane %v205, %v332
  %v334 = vsel %vm294, %v333, %v329
  %vm335 = vcmask 1041409
  %v336 = vsel %vm335, %v334, %v295
  %vm337 = vcmask 523264
  %v338 = vsel %vm337, %v336, 0
  %340 = vmatprep.subr.mxu0 0.0
  %341 = vmatpush1.msra.mxu0 %v214
  %342 = vmatprep.subr.mxu0 0.0
  %343 = vmatpush1.msra.mxu0 %v215
  %344 = vmatprep.subr.mxu0 0.0
  %345 = vmatpush1.msra.mxu0 %v216
  %346 = vmatprep.subr.mxu0 0.0
  %347 = vmatpush1.msra.mxu0 %v217
  %348 = vmatprep.subr.mxu0 0.0
  %349 = vmatpush1.msra.mxu0 %v218
  %350 = vmatprep.subr.mxu0 0.0
  %351 = vmatpush1.msra.mxu0 %v219
  %352 = vmatprep.subr.mxu0 0.0
  %353 = vmatpush1.msra.mxu0 %v220
  %354 = vmatprep.subr.mxu0 0.0
  %355 = vmatpush1.msra.mxu0 %v221
  %356 = vmatprep.subr.mxu0 0.0
  %357 = vmatpush1.msra.mxu0 0.0
  %358 = vmatprep.subr.mxu0 0.0
  %359 = vmatpush1.msra.mxu0 0.0
  %360 = vmatprep.subr.mxu0 0.0
  %361 = vmatpush1.msra.mxu0 0.0
  %362 = vmatprep.subr.mxu0 0.0
  %363 = vmatpush1.msra.mxu0 0.0
  %364 = vmatprep.subr.mxu0 0.0
  %365 = vmatpush1.msra.mxu0 0.0
  %366 = vmatprep.subr.mxu0 0.0
  %367 = vmatpush1.msra.mxu0 0.0
  %368 = vmatprep.subr.mxu0 0.0
  %369 = vmatpush1.msra.mxu0 0.0
  %370 = vmatprep.subr.mxu0 0.0
  %371 = vmatpush1.msra.mxu0 0.0
  %372 = vmatprep.subr.mxu0 0.0
  %373 = vmatpush1.msra.mxu0 0.0
  %374 = vmatprep.subr.mxu0 0.0
  %375 = vmatpush1.msra.mxu0 0.0
  %376 = vmatprep.subr.mxu0 0.0
  %377 = vmatpush1.msra.mxu0 0.0
  %378 = vmatprep.subr.mxu0 0.0
  %379 = vmatpush1.msra.mxu0 0.0
  %380 = vmatprep.subr.mxu0 0.0
  %381 = vmatpush1.msra.mxu0 0.0
  %382 = vmatprep.subr.mxu0 0.0
  %383 = vmatpush1.msra.mxu0 0.0
  %384 = vmatprep.subr.mxu0 0.0
  %385 = vmatpush1.msra.mxu0 0.0
  %386 = vmatprep.subr.mxu0 0.0
  %387 = vmatpush1.msra.mxu0 0.0
  %388 = vmatprep.subr.mxu0 0.0
  %389 = vmatpush1.msra.mxu0 0.0
  %390 = vmatprep.subr.mxu0 0.0
  %391 = vmatpush1.msra.mxu0 0.0
  %392 = vmatprep.subr.mxu0 0.0
  %393 = vmatpush1.msra.mxu0 0.0
  %394 = vmatprep.subr.mxu0 0.0
  %395 = vmatpush1.msra.mxu0 0.0
  %396 = vmatprep.subr.mxu0 0.0
  %397 = vmatpush1.msra.mxu0 0.0
  %398 = vmatprep.subr.mxu0 0.0
  %399 = vmatpush1.msra.mxu0 0.0
  %400 = vmatprep.subr.mxu0 0.0
  %401 = vmatpush1.msra.mxu0 0.0
  %402 = vmatprep.subr.mxu0 0.0
  %403 = vmatpush1.msra.mxu0 0.0
  %404 = vmatprep.mubr.f32.mxu0 0.0
  %405 = vmatmul.mubr.f32.gmra.mrb[0].mxu0 %v338
  %v406 = vpop.f32.mrb[0].mxu0
  %v407 = vadd.f32 0.0, %v406
  %v408 = vpop.f32.mrb[0].mxu0
  %409 = vdwg.mxu0
  %v426 = vlaneseq
  %v427 = vshrl.u32 %v426, 7
  %v428 = vsub.s32 %v242, %v427
  %v429 = vrot.slane %v126, %v428
  %v430 = vlaneseq
  %v431 = vshrl.u32 %v430, 7
  %v432 = vsub.s32 %v247, %v431
  %v433 = vrot.slane %v127, %v432
  %v434 = vsel %vm252, %v433, %v429
  %v435 = vlaneseq
  %v436 = vshrl.u32 %v435, 7
  %v437 = vsub.s32 %v254, %v436
  %v438 = vrot.slane %v128, %v437
  %v439 = vsel %vm259, %v438, %v434
  %v440 = vlaneseq
  %v441 = vshrl.u32 %v440, 7
  %v442 = vsub.s32 %v261, %v441
  %v443 = vrot.slane %v129, %v442
  %v444 = vsel %vm266, %v443, %v439
  %v445 = vlaneseq
  %v446 = vshrl.u32 %v445, 7
  %v447 = vsub.s32 %v268, %v446
  %v448 = vrot.slane %v130, %v447
  %v449 = vsel %vm273, %v448, %v444
  %v450 = vlaneseq
  %v451 = vshrl.u32 %v450, 7
  %v452 = vsub.s32 %v275, %v451
  %v453 = vrot.slane %v131, %v452
  %v454 = vsel %vm280, %v453, %v449
  %v455 = vlaneseq
  %v456 = vshrl.u32 %v455, 7
  %v457 = vsub.s32 %v282, %v456
  %v458 = vrot.slane %v132, %v457
  %v459 = vsel %vm287, %v458, %v454
  %v460 = vlaneseq
  %v461 = vshrl.u32 %v460, 7
  %v462 = vsub.s32 %v289, %v461
  %v463 = vrot.slane %v133, %v462
  %v464 = vsel %vm294, %v463, %v459
  %v465 = vlaneseq
  %v466 = vshrl.u32 %v465, 7
  %v467 = vsub.s32 %v242, %v466
  %v468 = vrot.slane %v134, %v467
  %v469 = vlaneseq
  %v470 = vshrl.u32 %v469, 7
  %v471 = vsub.s32 %v247, %v470
  %v472 = vrot.slane %v135, %v471
  %v473 = vsel %vm252, %v472, %v468
  %v474 = vlaneseq
  %v475 = vshrl.u32 %v474, 7
  %v476 = vsub.s32 %v254, %v475
  %v477 = vrot.slane %v136, %v476
  %v478 = vsel %vm259, %v477, %v473
  %v479 = vlaneseq
  %v480 = vshrl.u32 %v479, 7
  %v481 = vsub.s32 %v261, %v480
  %v482 = vrot.slane %v137, %v481
  %v483 = vsel %vm266, %v482, %v478
  %v484 = vlaneseq
  %v485 = vshrl.u32 %v484, 7
  %v486 = vsub.s32 %v268, %v485
  %v487 = vrot.slane %v138, %v486
  %v488 = vsel %vm273, %v487, %v483
  %v489 = vlaneseq
  %v490 = vshrl.u32 %v489, 7
  %v491 = vsub.s32 %v275, %v490
  %v492 = vrot.slane %v139, %v491
  %v493 = vsel %vm280, %v492, %v488
  %v494 = vlaneseq
  %v495 = vshrl.u32 %v494, 7
  %v496 = vsub.s32 %v282, %v495
  %v497 = vrot.slane %v140, %v496
  %v498 = vsel %vm287, %v497, %v493
  %v499 = vlaneseq
  %v500 = vshrl.u32 %v499, 7
  %v501 = vsub.s32 %v289, %v500
  %v502 = vrot.slane %v141, %v501
  %v503 = vsel %vm294, %v502, %v498
  %v504 = vsel %vm335, %v503, %v464
  %v505 = vsel %vm337, %v504, 0
  %507 = vmatprep.subr.mxu0 0.0
  %508 = vmatpush1.msra.mxu0 %v206
  %509 = vmatprep.subr.mxu0 0.0
  %510 = vmatpush1.msra.mxu0 %v207
  %511 = vmatprep.subr.mxu0 0.0
  %512 = vmatpush1.msra.mxu0 %v208
  %513 = vmatprep.subr.mxu0 0.0
  %514 = vmatpush1.msra.mxu0 %v209
  %515 = vmatprep.subr.mxu0 0.0
  %516 = vmatpush1.msra.mxu0 %v210
  %517 = vmatprep.subr.mxu0 0.0
  %518 = vmatpush1.msra.mxu0 %v211
  %519 = vmatprep.subr.mxu0 0.0
  %520 = vmatpush1.msra.mxu0 %v212
  %521 = vmatprep.subr.mxu0 0.0
  %522 = vmatpush1.msra.mxu0 %v213
  %523 = vmatprep.subr.mxu0 0.0
  %524 = vmatpush1.msra.mxu0 0.0
  %525 = vmatprep.subr.mxu0 0.0
  %526 = vmatpush1.msra.mxu0 0.0
  %527 = vmatprep.subr.mxu0 0.0
  %528 = vmatpush1.msra.mxu0 0.0
  %529 = vmatprep.subr.mxu0 0.0
  %530 = vmatpush1.msra.mxu0 0.0
  %531 = vmatprep.subr.mxu0 0.0
  %532 = vmatpush1.msra.mxu0 0.0
  %533 = vmatprep.subr.mxu0 0.0
  %534 = vmatpush1.msra.mxu0 0.0
  %535 = vmatprep.subr.mxu0 0.0
  %536 = vmatpush1.msra.mxu0 0.0
  %537 = vmatprep.subr.mxu0 0.0
  %538 = vmatpush1.msra.mxu0 0.0
  %539 = vmatprep.subr.mxu0 0.0
  %540 = vmatpush1.msra.mxu0 0.0
  %541 = vmatprep.subr.mxu0 0.0
  %542 = vmatpush1.msra.mxu0 0.0
  %543 = vmatprep.subr.mxu0 0.0
  %544 = vmatpush1.msra.mxu0 0.0
  %545 = vmatprep.subr.mxu0 0.0
  %546 = vmatpush1.msra.mxu0 0.0
  %547 = vmatprep.subr.mxu0 0.0
  %548 = vmatpush1.msra.mxu0 0.0
  %549 = vmatprep.subr.mxu0 0.0
  %550 = vmatpush1.msra.mxu0 0.0
  %551 = vmatprep.subr.mxu0 0.0
  %552 = vmatpush1.msra.mxu0 0.0
  %553 = vmatprep.subr.mxu0 0.0
  %554 = vmatpush1.msra.mxu0 0.0
  %555 = vmatprep.subr.mxu0 0.0
  %556 = vmatpush1.msra.mxu0 0.0
  %557 = vmatprep.subr.mxu0 0.0
  %558 = vmatpush1.msra.mxu0 0.0
  %559 = vmatprep.subr.mxu0 0.0
  %560 = vmatpush1.msra.mxu0 0.0
  %561 = vmatprep.subr.mxu0 0.0
  %562 = vmatpush1.msra.mxu0 0.0
  %563 = vmatprep.subr.mxu0 0.0
  %564 = vmatpush1.msra.mxu0 0.0
  %565 = vmatprep.subr.mxu0 0.0
  %566 = vmatpush1.msra.mxu0 0.0
  %567 = vmatprep.subr.mxu0 0.0
  %568 = vmatpush1.msra.mxu0 0.0
  %569 = vmatprep.subr.mxu0 0.0
  %570 = vmatpush1.msra.mxu0 0.0
  %571 = vmatprep.mubr.f32.mxu0 0.0
  %572 = vmatmul.mubr.f32.gmra.mrb[0].mxu0 %v505
  %v573 = vpop.f32.mrb[0].mxu0
  %v574 = vadd.f32 %v407, %v573
  %v575 = vpop.f32.mrb[0].mxu0
  %576 = vdwg.mxu0
  %v577 = vlaneseq
  %v578 = vshrl.u32 %v577, 7
  %v579 = vsub.s32 0, %v578
  %v580 = vrot.slane %v222, %v579
  %v581 = vadd.f32 %v574, %v580
  %v582 = vmax.f32 %v581, 0.0
  %v583 = vlaneseq
  %v584 = vshrl.u32 %v583, 7
  %v585 = vsub.s32 0, %v584
  %v586 = vrot.slane %v224, %v585
  %vm587 = vcmask 31744
  %v589 = vsel %vm587, %v582, 0
  %vm591 = vcmask 1043456
  %v593 = vsel %vm591, %v223, 0
  %595 = vmatprep.subr.mxu0 0.0
  %596 = vmatpush1.msra.mxu0 %v593
  %597 = vmatprep.subr.mxu0 0.0
  %598 = vmatpush1.msra.mxu0 0.0
  %599 = vmatprep.subr.mxu0 0.0
  %600 = vmatpush1.msra.mxu0 0.0
  %601 = vmatprep.subr.mxu0 0.0
  %602 = vmatpush1.msra.mxu0 0.0
  %603 = vmatprep.subr.mxu0 0.0
  %604 = vmatpush1.msra.mxu0 0.0
  %605 = vmatprep.subr.mxu0 0.0
  %606 = vmatpush1.msra.mxu0 0.0
  %607 = vmatprep.subr.mxu0 0.0
  %608 = vmatpush1.msra.mxu0 0.0
  %609 = vmatprep.subr.mxu0 0.0
  %610 = vmatpush1.msra.mxu0 0.0
  %611 = vmatprep.subr.mxu0 0.0
  %612 = vmatpush1.msra.mxu0 0.0
  %613 = vmatprep.subr.mxu0 0.0
  %614 = vmatpush1.msra.mxu0 0.0
  %615 = vmatprep.subr.mxu0 0.0
  %616 = vmatpush1.msra.mxu0 0.0
  %617 = vmatprep.subr.mxu0 0.0
  %618 = vmatpush1.msra.mxu0 0.0
  %619 = vmatprep.subr.mxu0 0.0
  %620 = vmatpush1.msra.mxu0 0.0
  %621 = vmatprep.subr.mxu0 0.0
  %622 = vmatpush1.msra.mxu0 0.0
  %623 = vmatprep.subr.mxu0 0.0
  %624 = vmatpush1.msra.mxu0 0.0
  %625 = vmatprep.subr.mxu0 0.0
  %626 = vmatpush1.msra.mxu0 0.0
  %627 = vmatprep.subr.mxu0 0.0
  %628 = vmatpush1.msra.mxu0 0.0
  %629 = vmatprep.subr.mxu0 0.0
  %630 = vmatpush1.msra.mxu0 0.0
  %631 = vmatprep.subr.mxu0 0.0
  %632 = vmatpush1.msra.mxu0 0.0
  %633 = vmatprep.subr.mxu0 0.0
  %634 = vmatpush1.msra.mxu0 0.0
  %635 = vmatprep.subr.mxu0 0.0
  %636 = vmatpush1.msra.mxu0 0.0
  %637 = vmatprep.subr.mxu0 0.0
  %638 = vmatpush1.msra.mxu0 0.0
  %639 = vmatprep.subr.mxu0 0.0
  %640 = vmatpush1.msra.mxu0 0.0
  %641 = vmatprep.subr.mxu0 0.0
  %642 = vmatpush1.msra.mxu0 0.0
  %643 = vmatprep.subr.mxu0 0.0
  %644 = vmatpush1.msra.mxu0 0.0
  %645 = vmatprep.subr.mxu0 0.0
  %646 = vmatpush1.msra.mxu0 0.0
  %647 = vmatprep.subr.mxu0 0.0
  %648 = vmatpush1.msra.mxu0 0.0
  %649 = vmatprep.subr.mxu0 0.0
  %650 = vmatpush1.msra.mxu0 0.0
  %651 = vmatprep.subr.mxu0 0.0
  %652 = vmatpush1.msra.mxu0 0.0
  %653 = vmatprep.subr.mxu0 0.0
  %654 = vmatpush1.msra.mxu0 0.0
  %655 = vmatprep.subr.mxu0 0.0
  %656 = vmatpush1.msra.mxu0 0.0
  %657 = vmatprep.subr.mxu0 0.0
  %658 = vmatpush1.msra.mxu0 0.0
  %659 = vmatprep.mubr.f32.mxu0 0.0
  %660 = vmatmul.mubr.f32.gmra.mrb[0].mxu0 %v589
  %v661 = vpop.f32.mrb[0].mxu0
  %v662 = vadd.f32 %v586, %v661
  %v663 = vpop.f32.mrb[0].mxu0
  %664 = vdwg.mxu0
  %v665 = vxor.u32 %v662, 2147483648
  %v666 = vmul.f32 %v665, 1.442695
  %v667 = vpow.pop %v666
  %v668 = vadd.f32 %v667, 1.0
  %v669 = vrcp.pop %v668
  %v670 = vmul.f32 1.0, %v669
  %v671 = vlaneseq
  %v672 = vshrl.u32 %v671, 7
  %v673 = vsub.s32 0, %v672
  %v674 = vrot.slane %v670, %v673
  %676 = vbcast.lane.b32.xlu0 %v674, 256
  %v677 = vpop.permute.xlu0 %676
  %s679 = sor.u32 256, 8
  %680 = vbcast.lane.b32.xlu0 %v674, %s679
  %v681 = vpop.permute.xlu0 %680
  %s683 = sor.u32 256, 16
  %684 = vbcast.lane.b32.xlu0 %v674, %s683
  %v685 = vpop.permute.xlu0 %684
  %s687 = sor.u32 256, 24
  %688 = vbcast.lane.b32.xlu0 %v674, %s687
  %v689 = vpop.permute.xlu0 %688
  %s691 = sor.u32 256, 32
  %692 = vbcast.lane.b32.xlu0 %v674, %s691
  %v693 = vpop.permute.xlu0 %692
  %s695 = sor.u32 256, 40
  %696 = vbcast.lane.b32.xlu0 %v674, %s695
  %v697 = vpop.permute.xlu0 %696
  %s699 = sor.u32 256, 48
  %700 = vbcast.lane.b32.xlu0 %v674, %s699
  %v701 = vpop.permute.xlu0 %700
  %s703 = sor.u32 256, 56
  %704 = vbcast.lane.b32.xlu0 %v674, %s703
  %v705 = vpop.permute.xlu0 %704
  %v706 = vlaneseq
  %v707 = vshrl.u32 %v706, 7
  %v708 = vsub.s32 1, %v707
  %v709 = vrot.slane %v670, %v708
  %711 = vbcast.lane.b32.xlu0 %v709, 256
  %v712 = vpop.permute.xlu0 %711
  %s714 = sor.u32 256, 8
  %715 = vbcast.lane.b32.xlu0 %v709, %s714
  %v716 = vpop.permute.xlu0 %715
  %s718 = sor.u32 256, 16
  %719 = vbcast.lane.b32.xlu0 %v709, %s718
  %v720 = vpop.permute.xlu0 %719
  %s722 = sor.u32 256, 24
  %723 = vbcast.lane.b32.xlu0 %v709, %s722
  %v724 = vpop.permute.xlu0 %723
  %s726 = sor.u32 256, 32
  %727 = vbcast.lane.b32.xlu0 %v709, %s726
  %v728 = vpop.permute.xlu0 %727
  %s730 = sor.u32 256, 40
  %731 = vbcast.lane.b32.xlu0 %v709, %s730
  %v732 = vpop.permute.xlu0 %731
  %s734 = sor.u32 256, 48
  %735 = vbcast.lane.b32.xlu0 %v709, %s734
  %v736 = vpop.permute.xlu0 %735
  %s738 = sor.u32 256, 56
  %739 = vbcast.lane.b32.xlu0 %v709, %s738
  %v740 = vpop.permute.xlu0 %739
  %v741 = vmul.f32 %v677, %v14
  %v742 = vmul.f32 %v677, %v15
  %v743 = vmul.f32 %v681, %v16
  %v744 = vmul.f32 %v681, %v17
  %v745 = vmul.f32 %v685, %v18
  %v746 = vmul.f32 %v685, %v19
  %v747 = vmul.f32 %v689, %v20
  %v748 = vmul.f32 %v689, %v21
  %v749 = vmul.f32 %v693, %v22
  %v750 = vmul.f32 %v693, %v23
  %v751 = vmul.f32 %v697, %v24
  %v752 = vmul.f32 %v697, %v25
  %v753 = vmul.f32 %v701, %v26
  %v754 = vmul.f32 %v701, %v27
  %v755 = vmul.f32 %v705, %v28
  %v756 = vmul.f32 %v705, %v29
  %v757 = vmul.f32 %v712, %v30
  %v758 = vmul.f32 %v712, %v31
  %v759 = vmul.f32 %v716, %v32
  %v760 = vmul.f32 %v716, %v33
  %v761 = vmul.f32 %v720, %v34
  %v762 = vmul.f32 %v720, %v35
  %v763 = vmul.f32 %v724, %v36
  %v764 = vmul.f32 %v724, %v37
  %v765 = vmul.f32 %v728, %v38
  %v766 = vmul.f32 %v728, %v39
  %v767 = vmul.f32 %v732, %v40
  %v768 = vmul.f32 %v732, %v41
  %v769 = vmul.f32 %v736, %v42
  %v770 = vmul.f32 %v736, %v43
  %v771 = vmul.f32 %v740, %v44
  %v772 = vmul.f32 %v740, %v45
  %v773 = vadd.f32 %v46, %v741
  %v774 = vadd.f32 %v47, %v742
  %v775 = vadd.f32 %v48, %v743
  %v776 = vadd.f32 %v49, %v744
  %v777 = vadd.f32 %v50, %v745
  %v778 = vadd.f32 %v51, %v746
  %v779 = vadd.f32 %v52, %v747
  %v780 = vadd.f32 %v53, %v748
  %v781 = vadd.f32 %v54, %v749
  %v782 = vadd.f32 %v55, %v750
  %v783 = vadd.f32 %v56, %v751
  %v784 = vadd.f32 %v57, %v752
  %v785 = vadd.f32 %v58, %v753
  %v786 = vadd.f32 %v59, %v754
  %v787 = vadd.f32 %v60, %v755
  %v788 = vadd.f32 %v61, %v756
  %v789 = vadd.f32 %v62, %v757
  %v790 = vadd.f32 %v63, %v758
  %v791 = vadd.f32 %v64, %v759
  %v792 = vadd.f32 %v65, %v760
  %v793 = vadd.f32 %v66, %v761
  %v794 = vadd.f32 %v67, %v762
  %v795 = vadd.f32 %v68, %v763
  %v796 = vadd.f32 %v69, %v764
  %v797 = vadd.f32 %v70, %v765
  %v798 = vadd.f32 %v71, %v766
  %v799 = vadd.f32 %v72, %v767
  %v800 = vadd.f32 %v73, %v768
  %v801 = vadd.f32 %v74, %v769
  %v802 = vadd.f32 %v75, %v770
  %v803 = vadd.f32 %v76, %v771
  %v804 = vadd.f32 %v77, %v772
  %805 = vst [vmem:[%s3] sm:$0xff] %v773
  %806 = vst [vmem:[%s3 + $0x8] sm:$0xff] %v774
  %807 = vst [vmem:[%s3 + $0x10] sm:$0xff] %v775
  %808 = vst [vmem:[%s3 + $0x18] sm:$0xff] %v776
  %809 = vst [vmem:[%s3 + $0x20] sm:$0xff] %v777
  %810 = vst [vmem:[%s3 + $0x28] sm:$0xff] %v778
  %811 = vst [vmem:[%s3 + $0x30] sm:$0xff] %v779
  %812 = vst [vmem:[%s3 + $0x38] sm:$0xff] %v780
  %813 = vst [vmem:[%s3 + $0x40] sm:$0xff] %v781
  %814 = vst [vmem:[%s3 + $0x48] sm:$0xff] %v782
  %815 = vst [vmem:[%s3 + $0x50] sm:$0xff] %v783
  %816 = vst [vmem:[%s3 + $0x58] sm:$0xff] %v784
  %817 = vst [vmem:[%s3 + $0x60] sm:$0xff] %v785
  %818 = vst [vmem:[%s3 + $0x68] sm:$0xff] %v786
  %819 = vst [vmem:[%s3 + $0x70] sm:$0xff] %v787
  %820 = vst [vmem:[%s3 + $0x78] sm:$0xff] %v788
  %821 = vst [vmem:[%s3 + $0x80] sm:$0xff] %v789
  %822 = vst [vmem:[%s3 + $0x88] sm:$0xff] %v790
  %823 = vst [vmem:[%s3 + $0x90] sm:$0xff] %v791
  %824 = vst [vmem:[%s3 + $0x98] sm:$0xff] %v792
  %825 = vst [vmem:[%s3 + $0xa0] sm:$0xff] %v793
  %826 = vst [vmem:[%s3 + $0xa8] sm:$0xff] %v794
  %827 = vst [vmem:[%s3 + $0xb0] sm:$0xff] %v795
  %828 = vst [vmem:[%s3 + $0xb8] sm:$0xff] %v796
  %829 = vst [vmem:[%s3 + $0xc0] sm:$0xff] %v797
  %830 = vst [vmem:[%s3 + $0xc8] sm:$0xff] %v798
  %831 = vst [vmem:[%s3 + $0xd0] sm:$0xff] %v799
  %832 = vst [vmem:[%s3 + $0xd8] sm:$0xff] %v800
  %833 = vst [vmem:[%s3 + $0xe0] sm:$0xff] %v801
  %834 = vst [vmem:[%s3 + $0xe8] sm:$0xff] %v802
  %835 = vst [vmem:[%s3 + $0xf0] sm:$0xff] %v803
  %836 = vst [vmem:[%s3 + $0xf8] sm:$0xff] %v804
  // Predicated region
  $region14: #{fsp_forward.1} parent=0 // pred_check
    _
  $region15: #{fsp_forward.1} parent=0 // pred_check_branch
    %838 = sbr.rel (0) target = $region17
  $region16: #{fsp_forward.1} parent=0 // pred_region
    _
  $region17: #{fsp_forward.1} parent=0 // pred_fallthru
    _
  // Predicated region
  $region18: #{fsp_forward.1} parent=0 // pred_check
    _
  $region19: #{fsp_forward.1} parent=0 // pred_check_branch
    %840 = sbr.rel (0) target = $region21
  $region20: #{fsp_forward.1} parent=0 // pred_region
    _
  $region21: #{fsp_forward.1} parent=0 // pred_fallthru
    _

</llo_original>
